<compile_context>
chip_gen: v5e
topology: v5e:2x2
jax: 0.10.0
libtpu: 0.0.40
codegen_flags: <defaults>
</compile_context>

<pallas_src>
import math
from functools import partial

import jax
import jax.numpy as jnp
from jax import lax
from jax.experimental import pallas as pl
from jax.experimental.pallas import tpu as pltpu


_INV_SQRT2 = 1.0 / math.sqrt(2.0)
_SQRT_2_OVER_PI = math.sqrt(2.0 / math.pi)


def _round_up(x, m):
    return ((x + m - 1) // m) * m


def _hidden_layer_kernel(x_ref, w1_ref, b1_ref, o_ref, *, mxu_dtype, approximate_gelu):
    """gelu(x @ W1 + b1) for one (tm, tn) output tile."""
    x = x_ref[...].astype(mxu_dtype)        # in-kernel cast: no extra HBM pass over x
    w1 = w1_ref[...]                        # already mxu_dtype (pre-cast once outside)
    h = jnp.dot(x, w1, preferred_element_type=jnp.float32) + b1_ref[...]
    if approximate_gelu:
        # tanh-approximate GELU: the transcendental goes to the EUP slot
        # (nearly free next to the VALU epilogue).  Opt-in: numerics differ.
        g = 0.5 * h * (1.0 + jnp.tanh(_SQRT_2_OVER_PI * (h + 0.044715 * (h * h * h))))
    else:
        # Exact erf GELU == torch.nn.GELU() default semantics.
        g = 0.5 * h * (1.0 + lax.erf(h * _INV_SQRT2))
    o_ref[...] = g.astype(o_ref.dtype)


def hidden_layer_extractor(x, w1, b1, *, tm=None, mxu_bf16=False,
                           approximate_gelu=False, out_dtype=None):
    """Pallas wrapper: returns the hidden (GELU) activation of the inner net.

    x  : (B, D_IN)      float32
    w1 : (D_IN, D_HID)  float32 (Linear1 weight, stored transposed)
    b1 : (D_HID,) or (1, D_HID) float32
    ->   (B, D_HID)     out_dtype (default: x.dtype)

    mxu_bf16=True (opt-in) casts x/W1 to bf16 for the MXU (f32 accumulation).
    approximate_gelu=True (opt-in) uses the tanh-approximate GELU.
    """
    B, D_IN = x.shape
    D_HID = w1.shape[1]
    out_dtype = jnp.dtype(x.dtype) if out_dtype is None else jnp.dtype(out_dtype)
    mxu_dtype = jnp.bfloat16 if mxu_bf16 else jnp.float32

    # ---- batch tiling: aim for >=8 grid steps so the pipeline has depth -----
    if tm is None:
        tm = min(512, max(16, _round_up(pl.cdiv(B, 8), 16)))
    grid_m = pl.cdiv(B, tm)   # no batch pad: Pallas handles the ragged last block

    # ---- hidden-dim (lane) tiling: lane-dense stores, small out tile on v7x -
    N_PAD = _round_up(D_HID, 128)
    if N_PAD <= 512:
        tn = N_PAD
    elif N_PAD % 512 == 0:
        tn = 512
    elif N_PAD % 256 == 0:
        tn = 256
    else:
        tn = 128
    grid_n = N_PAD // tn

    # ---- weights: pad / cast ONCE, outside the hot path ---------------------
    w1_p = w1.astype(mxu_dtype)
    b1_p = jnp.reshape(b1, (1, D_HID)).astype(jnp.float32)
    if N_PAD != D_HID:
        w1_p = jnp.pad(w1_p, ((0, 0), (0, N_PAD - D_HID)))
        b1_p = jnp.pad(b1_p, ((0, 0), (0, N_PAD - D_HID)))

    kernel = partial(_hidden_layer_kernel, mxu_dtype=mxu_dtype,
                     approximate_gelu=approximate_gelu)
    x_bytes = jnp.dtype(x.dtype).itemsize
    w_bytes = jnp.dtype(mxu_dtype).itemsize
    o_bytes = out_dtype.itemsize

    def run(single_buffer_weights):
        w_bufs = 1 if single_buffer_weights else 2
        w_mode = pl.Buffered(1) if single_buffer_weights else None
        # Double-buffered x & out tiles + resident W1/b1 + f32 h / GELU temps.
        vmem_needed = (2 * tm * D_IN * x_bytes
                       + w_bufs * D_IN * tn * w_bytes
                       + w_bufs * tn * 4
                       + 2 * tm * tn * o_bytes
                       + 2 * tm * tn * 4)
        # >= default scoped VMEM with headroom; capped below v7x physical 64 MiB.
        vmem_limit = int(min(max(2 * vmem_needed, 32 << 20), 56 << 20))

        cost = pl.CostEstimate(
            flops=2 * B * D_IN * N_PAD,
            transcendentals=B * N_PAD,
            bytes_accessed=(B * D_IN * x_bytes
                            + D_IN * N_PAD * w_bytes
                            + N_PAD * 4
                            + B * N_PAD * o_bytes),
        )

        return pl.pallas_call(
            kernel,
            out_shape=jax.ShapeDtypeStruct((B, N_PAD), out_dtype),
            grid_spec=pltpu.PrefetchScalarGridSpec(
                num_scalar_prefetch=0,
                grid=(grid_m, grid_n),
                in_specs=[
                    pl.BlockSpec((tm, D_IN), lambda i, j: (i, 0)),                      # x tile
                    pl.BlockSpec((D_IN, tn), lambda i, j: (0, j), pipeline_mode=w_mode),  # W1
                    pl.BlockSpec((1, tn), lambda i, j: (0, j), pipeline_mode=w_mode),     # b1
                ],
                out_specs=pl.BlockSpec((tm, tn), lambda i, j: (i, j)),
            ),
            compiler_params=pltpu.CompilerParams(
                dimension_semantics=("parallel", "parallel"),
                vmem_limit_bytes=vmem_limit,
            ),
            cost_estimate=cost,
        )(x, w1_p, b1_p)

    # Single-buffer the weights only when their block index is constant across
    # the whole grid (grid_n == 1); otherwise keep default double buffering so
    # the next W1 column block is prefetched.
    if grid_n == 1:
        try:
            out_padded = run(True)
        except Exception:
            # pipeline_mode=pl.Buffered(1) not supported on this jax build;
            # fall back to default buffering (correctness unaffected).
            out_padded = run(False)
    else:
        out_padded = run(False)

    # Lane-padding strip only when needed (skipped when D_HID % 128 == 0).
    return out_padded[:, :D_HID] if N_PAD != D_HID else out_padded


def hidden_layer_extractor_ref(x, w1, b1):
    """Pure-JAX reference (exact-erf GELU, exact f32 accumulation)."""
    h = jnp.dot(x, w1, precision=lax.Precision.HIGHEST) + jnp.reshape(b1, (1, -1))
    return 0.5 * h * (1.0 + lax.erf(h * _INV_SQRT2))


if __name__ == "__main__":
    # Small shapes implied by the forward: x (B, D_IN), hidden (B, D_HID).
    B, D_IN, D_HID, D_OUT = 16, 32, 64, 16

    key = jax.random.PRNGKey(0)
    kx, kw1, kb1, kx2 = jax.random.split(key, 4)

    x = jax.random.normal(kx, (B, D_IN), dtype=jnp.float32)

    # Deterministic parameter init (PyTorch-Linear-style uniform bounds).
    bound1 = 1.0 / math.sqrt(D_IN)
    w1 = jax.random.uniform(kw1, (D_IN, D_HID), jnp.float32, -bound1, bound1)
    b1 = jax.random.uniform(kb1, (1, D_HID), jnp.float32, -bound1, bound1)
    # (Linear2 params of the inner net would be (D_HID, D_OUT) + (D_OUT,);
    #  unused because the extractor returns the layer=-2 output.)

    # Default path: f32 MXU inputs, exact-erf GELU (module semantics).
    out = jax.block_until_ready(hidden_layer_extractor(x, w1, b1))
    assert out.shape == (B, D_HID)
    ref = hidden_layer_extractor_ref(x, w1, b1)
    # Tolerance covers any MXU-internal rounding of the f32 matmul path.
    assert jnp.allclose(out, ref, atol=1e-2, rtol=1e-2), "mismatch vs f32 reference"

    # Ragged-batch path (B not a multiple of tm): exercises the un-padded grid.
    B2 = 40
    x2 = jax.random.normal(kx2, (B2, D_IN), dtype=jnp.float32)
    out2 = jax.block_until_ready(hidden_layer_extractor(x2, w1, b1))
    assert out2.shape == (B2, D_HID)
    ref2 = hidden_layer_extractor_ref(x2, w1, b1)
    assert jnp.allclose(out2, ref2, atol=1e-2, rtol=1e-2), "mismatch vs f32 reference (ragged B)"

    # Opt-in bf16 MXU-input path (x cast in-kernel; W1 pre-cast once).
    out_bf16 = jax.block_until_ready(hidden_layer_extractor(x, w1, b1, mxu_bf16=True))
    ref_bf16in = hidden_layer_extractor_ref(
        x.astype(jnp.bfloat16).astype(jnp.float32),
        w1.astype(jnp.bfloat16).astype(jnp.float32),
        b1,
    )
    assert jnp.allclose(out_bf16, ref_bf16in, atol=1e-3, rtol=1e-3), "mismatch vs bf16-input ref"
    assert jnp.allclose(out_bf16, ref, atol=3e-2, rtol=3e-2), "mismatch vs f32 ref (bf16 path)"

    print("KERNEL_OK")
</pallas_src>

<mosaic_0001>
module attributes {stable_mosaic.version = 11 : i64} {
  func.func @_hidden_layer_kernel(%arg0: i32, %arg1: i32, %arg2: memref<16x32xf32, #tpu.memory_space<vmem>>, %arg3: memref<32x128xf32, #tpu.memory_space<vmem>>, %arg4: memref<1x128xf32, #tpu.memory_space<vmem>>, %arg5: memref<16x128xf32, #tpu.memory_space<vmem>>) attributes {dimension_semantics = [#tpu.dimension_semantics<parallel>, #tpu.dimension_semantics<parallel>], iteration_bounds = array<i64: 1, 1>, scalar_prefetch = 0 : i64, scratch_operands = 0 : i64, tpu.core_type = #tpu.core_type<tc>, window_params = [{transform_indices = @transform_0, window_bounds = array<i64: 16, 32>}, {pipeline_mode = #tpu.pipeline_mode<synchronous>, transform_indices = @transform_1, window_bounds = array<i64: 32, 128>}, {pipeline_mode = #tpu.pipeline_mode<synchronous>, transform_indices = @transform_2, window_bounds = array<i64: 1, 128>}, {transform_indices = @transform_3, window_bounds = array<i64: 16, 128>}]} {
    %c0 = arith.constant 0 : index
    %c0_0 = arith.constant 0 : index
    %0 = vector.load %arg2[%c0, %c0_0] : memref<16x32xf32, #tpu.memory_space<vmem>>, vector<16x32xf32>
    %c0_1 = arith.constant 0 : index
    %c0_2 = arith.constant 0 : index
    %1 = vector.load %arg3[%c0_1, %c0_2] : memref<32x128xf32, #tpu.memory_space<vmem>>, vector<32x128xf32>
    %cst = arith.constant dense<0.000000e+00> : vector<16x128xf32>
    %2 = tpu.matmul %0, %1, %cst {dimension_numbers = #tpu.dot_dimension_numbers<[1], [0], [0], [1], [0, 0, 1, 1], [], []>} : vector<16x32xf32>, vector<32x128xf32>, vector<16x128xf32> -> vector<16x128xf32>
    %c0_3 = arith.constant 0 : index
    %c0_4 = arith.constant 0 : index
    %3 = vector.load %arg4[%c0_3, %c0_4] : memref<1x128xf32, #tpu.memory_space<vmem>>, vector<1x128xf32>
    %4 = vector.broadcast %3 : vector<1x128xf32> to vector<16x128xf32>
    %5 = arith.addf %2, %4 : vector<16x128xf32>
    %cst_5 = arith.constant 5.000000e-01 : f32
    %6 = vector.broadcast %cst_5 : f32 to vector<16x128xf32>
    %7 = arith.mulf %6, %5 : vector<16x128xf32>
    %cst_6 = arith.constant 0.707106769 : f32
    %8 = vector.broadcast %cst_6 : f32 to vector<16x128xf32>
    %9 = arith.mulf %5, %8 : vector<16x128xf32>
    %10 = math.erf %9 : vector<16x128xf32>
    %cst_7 = arith.constant 1.000000e+00 : f32
    %11 = vector.broadcast %cst_7 : f32 to vector<16x128xf32>
    %12 = arith.addf %11, %10 : vector<16x128xf32>
    %13 = arith.mulf %7, %12 : vector<16x128xf32>
    %c0_8 = arith.constant 0 : index
    %c0_9 = arith.constant 0 : index
    %14 = vector.load %arg5[%c0_8, %c0_9] : memref<16x128xf32, #tpu.memory_space<vmem>>, vector<16x128xf32>
    tpu.vector_store %arg5[%c0_8, %c0_9], %13 {strides = array<i32>} : memref<16x128xf32, #tpu.memory_space<vmem>>, vector<16x128xf32>,
    return
  }
  func.func @transform_0(%arg0: i32, %arg1: i32) -> (i32, i32) {
    %c0_i32 = arith.constant 0 : i32
    %c0_i32_0 = arith.constant 0 : i32
    return %arg0, %c0_i32 : i32, i32
  }
  func.func @transform_1(%arg0: i32, %arg1: i32) -> (i32, i32) {
    %c0_i32 = arith.constant 0 : i32
    %c0_i32_0 = arith.constant 0 : i32
    return %c0_i32, %arg1 : i32, i32
  }
  func.func @transform_2(%arg0: i32, %arg1: i32) -> (i32, i32) {
    %c0_i32 = arith.constant 0 : i32
    %c0_i32_0 = arith.constant 0 : i32
    return %c0_i32, %arg1 : i32, i32
  }
  func.func @transform_3(%arg0: i32, %arg1: i32) -> (i32, i32) {
    %c0_i32 = arith.constant 0 : i32
    return %arg0, %arg1 : i32, i32
  }
}

module attributes {stable_mosaic.version = 11 : i64} {
  func.func @_hidden_layer_kernel(%arg0: i32, %arg1: i32, %arg2: memref<16x32xf32, #tpu.memory_space<vmem>>, %arg3: memref<32x128xf32, #tpu.memory_space<vmem>>, %arg4: memref<1x128xf32, #tpu.memory_space<vmem>>, %arg5: memref<16x128xf32, #tpu.memory_space<vmem>>) attributes {dimension_semantics = [#tpu.dimension_semantics<parallel>, #tpu.dimension_semantics<parallel>], iteration_bounds = array<i64: 1, 1>, scalar_prefetch = 0 : i64, scratch_operands = 0 : i64, tpu.core_type = #tpu.core_type<tc>, window_params = [{transform_indices = @transform_0, window_bounds = array<i64: 16, 32>}, {transform_indices = @transform_1, window_bounds = array<i64: 32, 128>}, {transform_indices = @transform_2, window_bounds = array<i64: 1, 128>}, {transform_indices = @transform_3, window_bounds = array<i64: 16, 128>}]} {
    %c0 = arith.constant 0 : index
    %c0_0 = arith.constant 0 : index
    %0 = vector.load %arg2[%c0, %c0_0] : memref<16x32xf32, #tpu.memory_space<vmem>>, vector<16x32xf32>
    %c0_1 = arith.constant 0 : index
    %c0_2 = arith.constant 0 : index
    %1 = vector.load %arg3[%c0_1, %c0_2] : memref<32x128xf32, #tpu.memory_space<vmem>>, vector<32x128xf32>
    %cst = arith.constant dense<0.000000e+00> : vector<16x128xf32>
    %2 = tpu.matmul %0, %1, %cst {dimension_numbers = #tpu.dot_dimension_numbers<[1], [0], [0], [1], [0, 0, 1, 1], [], []>} : vector<16x32xf32>, vector<32x128xf32>, vector<16x128xf32> -> vector<16x128xf32>
    %c0_3 = arith.constant 0 : index
    %c0_4 = arith.constant 0 : index
    %3 = vector.load %arg4[%c0_3, %c0_4] : memref<1x128xf32, #tpu.memory_space<vmem>>, vector<1x128xf32>
    %4 = vector.broadcast %3 : vector<1x128xf32> to vector<16x128xf32>
    %5 = arith.addf %2, %4 : vector<16x128xf32>
    %cst_5 = arith.constant 5.000000e-01 : f32
    %6 = vector.broadcast %cst_5 : f32 to vector<16x128xf32>
    %7 = arith.mulf %6, %5 : vector<16x128xf32>
    %cst_6 = arith.constant 0.707106769 : f32
    %8 = vector.broadcast %cst_6 : f32 to vector<16x128xf32>
    %9 = arith.mulf %5, %8 : vector<16x128xf32>
    %10 = math.erf %9 : vector<16x128xf32>
    %cst_7 = arith.constant 1.000000e+00 : f32
    %11 = vector.broadcast %cst_7 : f32 to vector<16x128xf32>
    %12 = arith.addf %11, %10 : vector<16x128xf32>
    %13 = arith.mulf %7, %12 : vector<16x128xf32>
    %c0_8 = arith.constant 0 : index
    %c0_9 = arith.constant 0 : index
    %14 = vector.load %arg5[%c0_8, %c0_9] : memref<16x128xf32, #tpu.memory_space<vmem>>, vector<16x128xf32>
    tpu.vector_store %arg5[%c0_8, %c0_9], %13 {strides = array<i32>} : memref<16x128xf32, #tpu.memory_space<vmem>>, vector<16x128xf32>,
    return
  }
  func.func @transform_0(%arg0: i32, %arg1: i32) -> (i32, i32) {
    %c0_i32 = arith.constant 0 : i32
    %c0_i32_0 = arith.constant 0 : i32
    return %arg0, %c0_i32 : i32, i32
  }
  func.func @transform_1(%arg0: i32, %arg1: i32) -> (i32, i32) {
    %c0_i32 = arith.constant 0 : i32
    %c0_i32_0 = arith.constant 0 : i32
    return %c0_i32, %arg1 : i32, i32
  }
  func.func @transform_2(%arg0: i32, %arg1: i32) -> (i32, i32) {
    %c0_i32 = arith.constant 0 : i32
    %c0_i32_0 = arith.constant 0 : i32
    return %c0_i32, %arg1 : i32, i32
  }
  func.func @transform_3(%arg0: i32, %arg1: i32) -> (i32, i32) {
    %c0_i32 = arith.constant 0 : i32
    return %arg0, %arg1 : i32, i32
  }
}

</mosaic_0001>

<llo_original>
// kernel: tpu_custom_call.1
$region0: #{tpu_custom_call.1}
  #allocation0 [shape = 'u32[]', space=smem, size = 0x4, offset = 0x4, fixed_abs, tag = 'smem constant byte address 0x4 - core index']
  #allocation1 [shape = 'u32[72,128]{1,0:T(1,128)}', space=vmem, size = 0x9000, scoped, tag = 'internal scratch']
  %s0 = inlined_call_operand.hbm [shape: f32[16,32], index: 0, kind: input, shape index: {}]
  %s1 = inlined_call_operand.hbm [shape: f32[32,128], index: 1, kind: input, shape index: {}]
  %s2 = inlined_call_operand.vmem [shape: f32[1,128], index: 2, kind: input, shape index: {}]
  %s3 = inlined_call_operand.hbm [shape: f32[16,128], index: 3, kind: output, shape index: {}]
  %s4 = sld [smem:[#allocation0]]
  $region30: #{tpu_custom_call.1} parent=0
    _
  %s6 = ssub.s32 1, %s4
  %s7 = scalar_select 0, %s6, %s4
  $region1: #{tpu_custom_call.1} parent=0
    #allocation2 [shape = 'u8[8192]{0}', space=vmem, size = 0x2000, scoped, tag = 'input window, operand 0, single buffered']
    #allocation3 [shape = 's32[1]{0}', space=sflag, size = 0x4, scoped, tag = 'scoped memory for tpu_custom_call.1']
    #allocation4 [shape = 's32[1]{0}', space=sflag, size = 0x4, scoped, tag = 'scoped memory for tpu_custom_call.1']
    #allocation5 [shape = 'u8[16384]{0}', space=vmem, size = 0x4000, scoped, tag = 'input window, operand 1, single buffered']
    #allocation6 [shape = 's32[1]{0}', space=sflag, size = 0x4, scoped, tag = 'scoped memory for tpu_custom_call.1']
    #allocation7 [shape = 'u8[8192]{0}', space=vmem, size = 0x2000, scoped, tag = 'output window, operand 0, single buffered']
    %8 = vsyncpa [#allocation3], 0
    %9 = vsyncpa [#allocation6], 0
    %10 = vsyncpa [#allocation4], 0
    // Predicated region
    $region2: #{tpu_custom_call.1} parent=1 // pred_check
      _
    $region3: #{tpu_custom_call.1} parent=1 // pred_check_branch
      %12 = sbr.rel (0) target = $region5
    $region4: #{tpu_custom_call.1} parent=1 // pred_region
      %14 = vsyncadd [#allocation3], 0
      %s15 = sshll.u32 %s0, 4
      %s16 = int_to_ptr.hbm [resolvable:$true] %s15
      %s17 = sshll.u32 [#allocation2], 4
      %s18 = int_to_ptr.vmem [resolvable:$true] %s17
      %23 = dma.hbm_to_vmem [thread:$0]  %s16, 256, %s18, [#allocation3], 128, 128, 8
    $region5: #{tpu_custom_call.1} parent=1 // pred_fallthru
      _
    // Predicated region
    $region6: #{tpu_custom_call.1} parent=1 // pred_check
      _
    $region7: #{tpu_custom_call.1} parent=1 // pred_check_branch
      %25 = sbr.rel (0) target = $region9
    $region8: #{tpu_custom_call.1} parent=1 // pred_region
      %27 = vsyncadd [#allocation6], 0
      %s28 = sshll.u32 %s1, 4
      %s29 = int_to_ptr.hbm [resolvable:$true] %s28
      %s30 = sshll.u32 [#allocation5], 4
      %s31 = int_to_ptr.vmem [resolvable:$true] %s30
      %36 = dma.hbm_to_vmem [thread:$0]  %s29, 512, %s31, [#allocation6], 128, 128, 8
    $region9: #{tpu_custom_call.1} parent=1 // pred_fallthru
      _
    // Predicated region
    $region10: #{tpu_custom_call.1} parent=1 // pred_check
      _
    $region11: #{tpu_custom_call.1} parent=1 // pred_check_branch
      %38 = sbr.rel (0) target = $region13
    $region12: #{tpu_custom_call.1} parent=1 // pred_region
      _
    $region13: #{tpu_custom_call.1} parent=1 // pred_fallthru
      _
    // Predicated region
    $region14: #{tpu_custom_call.1} parent=1 // pred_check
      _
    $region15: #{tpu_custom_call.1} parent=1 // pred_check_branch
      %40 = sbr.rel (0) target = $region17
    $region16: #{tpu_custom_call.1} parent=1 // pred_region
      %42 = dma.done [#allocation3], 256
    $region17: #{tpu_custom_call.1} parent=1 // pred_fallthru
      _
    // Predicated region
    $region18: #{tpu_custom_call.1} parent=1 // pred_check
      _
    $region19: #{tpu_custom_call.1} parent=1 // pred_check_branch
      %44 = sbr.rel (0) target = $region21
    $region20: #{tpu_custom_call.1} parent=1 // pred_region
      %46 = dma.done [#allocation6], 512
    $region21: #{tpu_custom_call.1} parent=1 // pred_fallthru
      _
    %v47 = vld [vmem:[#allocation2] sm:$0xff]
    %v48 = vld [vmem:[#allocation2 + $0x8] sm:$0xff]
    %v49 = vld [vmem:[#allocation5] sm:$0xff]
    %v50 = vld [vmem:[#allocation5 + $0x8] sm:$0xff]
    %v51 = vld [vmem:[#allocation5 + $0x10] sm:$0xff]
    %v52 = vld [vmem:[#allocation5 + $0x18] sm:$0xff]
    %v53 = vld [vmem:[%s2] sm:$0x1]
    %v55 = vperm.slane %v53, 0
    %vm57 = vcmask 261120
    %v59 = vsel %vm57, %v47, 0
    %v62 = vsel %vm57, %v48, 0
    %64 = vmatpush.msra.mxu0 0.0
    %65 = vmatpush.msra.mxu0 0.0
    %66 = vmatpush.msra.mxu0 0.0
    %67 = vmatpush.msra.mxu0 0.0
    %68 = vmatpush.msra.mxu0 0.0
    %69 = vmatpush.msra.mxu0 0.0
    %70 = vmatpush.msra.mxu0 0.0
    %71 = vmatpush.msra.mxu0 0.0
    %72 = vmatpush.msra.mxu0 0.0
    %73 = vmatpush.msra.mxu0 0.0
    %74 = vmatpush.msra.mxu0 0.0
    %75 = vmatpush.msra.mxu0 0.0
    %76 = vmatpush.msra.mxu0 %v52
    %77 = vmatpush.msra.mxu0 %v51
    %78 = vmatpush.msra.mxu0 %v50
    %79 = vmatpush.msra.mxu0 %v49
    %80 = vmatmul.f32.gmra.mxu0 %v59
    %v81 = vpop.f32.mrf.mxu0
    %v82 = vadd.f32 %v55, %v81
    %83 = vmatmul.f32.gmra.mxu0 %v62
    %v84 = vpop.f32.mrf.mxu0
    %v85 = vadd.f32 %v55, %v84
    %86 = vdwg.mxu0
    %v87 = vmul.f32 %v82, 0.5
    %v88 = vmul.f32 %v85, 0.5
    %v89 = vmul.f32 %v82, 0.70710677
    %v90 = vmul.f32 %v85, 0.70710677
    %v91 = vmul.f32 %v89, %v89
    %v92 = vmin.f32 16.0, %v91
    %v93 = vmul.f32 %v92, 2.1237322e-06
    %v94 = vadd.f32 %v93, 0.00028619796
    %v95 = vmul.f32 %v92, %v94
    %v96 = vadd.f32 %v95, 0.0036580483
    %v97 = vmul.f32 %v92, %v96
    %v98 = vadd.f32 %v97, 0.05243302
    %v99 = vmul.f32 %v92, %v98
    %v100 = vadd.f32 %v99, 0.18741608
    %v101 = vmul.f32 %v92, %v100
    %v102 = vadd.f32 %v101, 1.1283791
    %v103 = vmul.f32 %v89, %v102
    %v104 = vmul.f32 %v92, 3.8918573e-05
    %v105 = vadd.f32 %v104, 0.001143296
    %v106 = vmul.f32 %v92, %v105
    %v107 = vadd.f32 %v106, 0.014752088
    %v108 = vmul.f32 %v92, %v107
    %v109 = vadd.f32 %v108, 0.112945676
    %v110 = vmul.f32 %v92, %v109
    %v111 = vadd.f32 %v110, 0.4994258
    %v112 = vmul.f32 %v92, %v111
    %v113 = vadd.f32 %v112, 1.0
    %v114 = vrcp.pop %v113
    %v115 = vmul.f32 %v113, %v114
    %v116 = vsub.f32 1.0, %v115
    %v117 = vmul.f32 %v114, %v116
    %v118 = vadd.f32 %v114, %v117
    %vm119 = vweird.f32 %v113
    %vm120 = vweird.f32 %v114
    %vm121 = vmor %vm119, %vm120
    %v122 = vsel %vm121, %v114, %v118
    %v123 = vand.u32 2147483647, %v113
    %vm124 = vcmp.eq.f32.partialorder %v123, 8.507059e+37
    %v125 = vand.u32 %v113, 2147483648
    %v126 = vor.u32 1.1754944e-38, %v125
    %v127 = vsel %vm124, %v126, %v122
    %v128 = vmul.f32 %v103, %v127
    %v129 = vmin.f32 %v128, 1.0
    %v130 = vmax.f32 %v129, -1.0
    %v131 = vmul.f32 %v90, %v90
    %v132 = vmin.f32 16.0, %v131
    %v133 = vmul.f32 %v132, 2.1237322e-06
    %v134 = vadd.f32 %v133, 0.00028619796
    %v135 = vmul.f32 %v132, %v134
    %v136 = vadd.f32 %v135, 0.0036580483
    %v137 = vmul.f32 %v132, %v136
    %v138 = vadd.f32 %v137, 0.05243302
    %v139 = vmul.f32 %v132, %v138
    %v140 = vadd.f32 %v139, 0.18741608
    %v141 = vmul.f32 %v132, %v140
    %v142 = vadd.f32 %v141, 1.1283791
    %v143 = vmul.f32 %v90, %v142
    %v144 = vmul.f32 %v132, 3.8918573e-05
    %v145 = vadd.f32 %v144, 0.001143296
    %v146 = vmul.f32 %v132, %v145
    %v147 = vadd.f32 %v146, 0.014752088
    %v148 = vmul.f32 %v132, %v147
    %v149 = vadd.f32 %v148, 0.112945676
    %v150 = vmul.f32 %v132, %v149
    %v151 = vadd.f32 %v150, 0.4994258
    %v152 = vmul.f32 %v132, %v151
    %v153 = vadd.f32 %v152, 1.0
    %v154 = vrcp.pop %v153
    %v155 = vmul.f32 %v153, %v154
    %v156 = vsub.f32 1.0, %v155
    %v157 = vmul.f32 %v154, %v156
    %v158 = vadd.f32 %v154, %v157
    %vm159 = vweird.f32 %v153
    %vm160 = vweird.f32 %v154
    %vm161 = vmor %vm159, %vm160
    %v162 = vsel %vm161, %v154, %v158
    %v163 = vand.u32 2147483647, %v153
    %vm164 = vcmp.eq.f32.partialorder %v163, 8.507059e+37
    %v165 = vand.u32 %v153, 2147483648
    %v166 = vor.u32 1.1754944e-38, %v165
    %v167 = vsel %vm164, %v166, %v162
    %v168 = vmul.f32 %v143, %v167
    %v169 = vmin.f32 %v168, 1.0
    %v170 = vmax.f32 %v169, -1.0
    %v171 = vadd.f32 %v130, 1.0
    %v172 = vadd.f32 %v170, 1.0
    %v173 = vmul.f32 %v87, %v171
    %v174 = vmul.f32 %v88, %v172
    %175 = vst [vmem:[#allocation7] sm:$0xff] %v173
    %176 = vst [vmem:[#allocation7 + $0x8] sm:$0xff] %v174
    // Predicated region
    $region22: #{tpu_custom_call.1} parent=1 // pred_check
      _
    $region23: #{tpu_custom_call.1} parent=1 // pred_check_branch
      %178 = sbr.rel (0) target = $region25
    $region24: #{tpu_custom_call.1} parent=1 // pred_region
      %180 = vsyncadd [#allocation4], 0
      %s181 = sshll.u32 [#allocation7], 4
      %s182 = int_to_ptr.vmem [resolvable:$true] %s181
      %s183 = sshll.u32 %s3, 4
      %s184 = int_to_ptr.hbm [resolvable:$true] %s183
      %189 = dma.vmem_to_hbm [thread:$0]  %s182, 256, %s184, [#allocation4], 128, 128, 8
    $region25: #{tpu_custom_call.1} parent=1 // pred_fallthru
      _
    // Predicated region
    $region26: #{tpu_custom_call.1} parent=1 // pred_check
      _
    $region27: #{tpu_custom_call.1} parent=1 // pred_check_branch
      %191 = sbr.rel (0) target = $region29
    $region28: #{tpu_custom_call.1} parent=1 // pred_region
      %193 = dma.done [#allocation4], 256
    $region29: #{tpu_custom_call.1} parent=1 // pred_fallthru
      _
    %194 = vsyncpa [#allocation3], 1
    %195 = vsyncpa [#allocation6], 1
    %196 = vsyncpa [#allocation4], 1

// kernel: tpu_custom_call.1
$region0: #{tpu_custom_call.1}
  #allocation0 [shape = 'u32[]', space=smem, size = 0x4, offset = 0x4, fixed_abs, tag = 'smem constant byte address 0x4 - core index']
  #allocation1 [shape = 'u32[72,128]{1,0:T(1,128)}', space=vmem, size = 0x9000, scoped, tag = 'internal scratch']
  %s0 = inlined_call_operand.hbm [shape: f32[16,32], index: 0, kind: input, shape index: {}]
  %s1 = inlined_call_operand.hbm [shape: f32[32,128], index: 1, kind: input, shape index: {}]
  %s2 = inlined_call_operand.vmem [shape: f32[1,128], index: 2, kind: input, shape index: {}]
  %s3 = inlined_call_operand.hbm [shape: f32[16,128], index: 3, kind: output, shape index: {}]
  %s4 = sld [smem:[#allocation0]]
  $region30: #{tpu_custom_call.1} parent=0
    _
  %s6 = ssub.s32 1, %s4
  %s7 = scalar_select 0, %s6, %s4
  $region1: #{tpu_custom_call.1} parent=0
    #allocation2 [shape = 'u8[8192]{0}', space=vmem, size = 0x2000, scoped, tag = 'input window, operand 0, single buffered']
    #allocation3 [shape = 's32[1]{0}', space=sflag, size = 0x4, scoped, tag = 'scoped memory for tpu_custom_call.1']
    #allocation4 [shape = 's32[1]{0}', space=sflag, size = 0x4, scoped, tag = 'scoped memory for tpu_custom_call.1']
    #allocation5 [shape = 'u8[16384]{0}', space=vmem, size = 0x4000, scoped, tag = 'input window, operand 1, single buffered']
    #allocation6 [shape = 's32[1]{0}', space=sflag, size = 0x4, scoped, tag = 'scoped memory for tpu_custom_call.1']
    #allocation7 [shape = 'u8[8192]{0}', space=vmem, size = 0x2000, scoped, tag = 'output window, operand 0, single buffered']
    %8 = vsyncpa [#allocation3], 0
    %9 = vsyncpa [#allocation6], 0
    %10 = vsyncpa [#allocation4], 0
    // Predicated region
    $region2: #{tpu_custom_call.1} parent=1 // pred_check
      _
    $region3: #{tpu_custom_call.1} parent=1 // pred_check_branch
      %12 = sbr.rel (0) target = $region5
    $region4: #{tpu_custom_call.1} parent=1 // pred_region
      %14 = vsyncadd [#allocation3], 0
      %s15 = sshll.u32 %s0, 4
      %s16 = int_to_ptr.hbm [resolvable:$true] %s15
      %s17 = sshll.u32 [#allocation2], 4
      %s18 = int_to_ptr.vmem [resolvable:$true] %s17
      %23 = dma.hbm_to_vmem [thread:$0]  %s16, 256, %s18, [#allocation3], 128, 128, 8
    $region5: #{tpu_custom_call.1} parent=1 // pred_fallthru
      _
    // Predicated region
    $region6: #{tpu_custom_call.1} parent=1 // pred_check
      _
    $region7: #{tpu_custom_call.1} parent=1 // pred_check_branch
      %25 = sbr.rel (0) target = $region9
    $region8: #{tpu_custom_call.1} parent=1 // pred_region
      %27 = vsyncadd [#allocation6], 0
      %s28 = sshll.u32 %s1, 4
      %s29 = int_to_ptr.hbm [resolvable:$true] %s28
      %s30 = sshll.u32 [#allocation5], 4
      %s31 = int_to_ptr.vmem [resolvable:$true] %s30
      %36 = dma.hbm_to_vmem [thread:$0]  %s29, 512, %s31, [#allocation6], 128, 128, 8
    $region9: #{tpu_custom_call.1} parent=1 // pred_fallthru
      _
    // Predicated region
    $region10: #{tpu_custom_call.1} parent=1 // pred_check
      _
    $region11: #{tpu_custom_call.1} parent=1 // pred_check_branch
      %38 = sbr.rel (0) target = $region13
    $region12: #{tpu_custom_call.1} parent=1 // pred_region
      _
    $region13: #{tpu_custom_call.1} parent=1 // pred_fallthru
      _
    // Predicated region
    $region14: #{tpu_custom_call.1} parent=1 // pred_check
      _
    $region15: #{tpu_custom_call.1} parent=1 // pred_check_branch
      %40 = sbr.rel (0) target = $region17
    $region16: #{tpu_custom_call.1} parent=1 // pred_region
      %42 = dma.done [#allocation3], 256
    $region17: #{tpu_custom_call.1} parent=1 // pred_fallthru
      _
    // Predicated region
    $region18: #{tpu_custom_call.1} parent=1 // pred_check
      _
    $region19: #{tpu_custom_call.1} parent=1 // pred_check_branch
      %44 = sbr.rel (0) target = $region21
    $region20: #{tpu_custom_call.1} parent=1 // pred_region
      %46 = dma.done [#allocation6], 512
    $region21: #{tpu_custom_call.1} parent=1 // pred_fallthru
      _
    %v47 = vld [vmem:[#allocation2] sm:$0xff]
    %v48 = vld [vmem:[#allocation2 + $0x8] sm:$0xff]
    %v49 = vld [vmem:[#allocation5] sm:$0xff]
    %v50 = vld [vmem:[#allocation5 + $0x8] sm:$0xff]
    %v51 = vld [vmem:[#allocation5 + $0x10] sm:$0xff]
    %v52 = vld [vmem:[#allocation5 + $0x18] sm:$0xff]
    %v53 = vld [vmem:[%s2] sm:$0x1]
    %v55 = vperm.slane %v53, 0
    %vm57 = vcmask 261120
    %v59 = vsel %vm57, %v47, 0
    %v62 = vsel %vm57, %v48, 0
    %64 = vmatpush.msra.mxu0 0.0
    %65 = vmatpush.msra.mxu0 0.0
    %66 = vmatpush.msra.mxu0 0.0
    %67 = vmatpush.msra.mxu0 0.0
    %68 = vmatpush.msra.mxu0 0.0
    %69 = vmatpush.msra.mxu0 0.0
    %70 = vmatpush.msra.mxu0 0.0
    %71 = vmatpush.msra.mxu0 0.0
    %72 = vmatpush.msra.mxu0 0.0
    %73 = vmatpush.msra.mxu0 0.0
    %74 = vmatpush.msra.mxu0 0.0
    %75 = vmatpush.msra.mxu0 0.0
    %76 = vmatpush.msra.mxu0 %v52
    %77 = vmatpush.msra.mxu0 %v51
    %78 = vmatpush.msra.mxu0 %v50
    %79 = vmatpush.msra.mxu0 %v49
    %80 = vmatmul.f32.gmra.mxu0 %v59
    %v81 = vpop.f32.mrf.mxu0
    %v82 = vadd.f32 %v55, %v81
    %83 = vmatmul.f32.gmra.mxu0 %v62
    %v84 = vpop.f32.mrf.mxu0
    %v85 = vadd.f32 %v55, %v84
    %86 = vdwg.mxu0
    %v87 = vmul.f32 %v82, 0.5
    %v88 = vmul.f32 %v85, 0.5
    %v89 = vmul.f32 %v82, 0.70710677
    %v90 = vmul.f32 %v85, 0.70710677
    %v91 = vmul.f32 %v89, %v89
    %v92 = vmin.f32 16.0, %v91
    %v93 = vmul.f32 %v92, 2.1237322e-06
    %v94 = vadd.f32 %v93, 0.00028619796
    %v95 = vmul.f32 %v92, %v94
    %v96 = vadd.f32 %v95, 0.0036580483
    %v97 = vmul.f32 %v92, %v96
    %v98 = vadd.f32 %v97, 0.05243302
    %v99 = vmul.f32 %v92, %v98
    %v100 = vadd.f32 %v99, 0.18741608
    %v101 = vmul.f32 %v92, %v100
    %v102 = vadd.f32 %v101, 1.1283791
    %v103 = vmul.f32 %v89, %v102
    %v104 = vmul.f32 %v92, 3.8918573e-05
    %v105 = vadd.f32 %v104, 0.001143296
    %v106 = vmul.f32 %v92, %v105
    %v107 = vadd.f32 %v106, 0.014752088
    %v108 = vmul.f32 %v92, %v107
    %v109 = vadd.f32 %v108, 0.112945676
    %v110 = vmul.f32 %v92, %v109
    %v111 = vadd.f32 %v110, 0.4994258
    %v112 = vmul.f32 %v92, %v111
    %v113 = vadd.f32 %v112, 1.0
    %v114 = vrcp.pop %v113
    %v115 = vmul.f32 %v113, %v114
    %v116 = vsub.f32 1.0, %v115
    %v117 = vmul.f32 %v114, %v116
    %v118 = vadd.f32 %v114, %v117
    %vm119 = vweird.f32 %v113
    %vm120 = vweird.f32 %v114
    %vm121 = vmor %vm119, %vm120
    %v122 = vsel %vm121, %v114, %v118
    %v123 = vand.u32 2147483647, %v113
    %vm124 = vcmp.eq.f32.partialorder %v123, 8.507059e+37
    %v125 = vand.u32 %v113, 2147483648
    %v126 = vor.u32 1.1754944e-38, %v125
    %v127 = vsel %vm124, %v126, %v122
    %v128 = vmul.f32 %v103, %v127
    %v129 = vmin.f32 %v128, 1.0
    %v130 = vmax.f32 %v129, -1.0
    %v131 = vmul.f32 %v90, %v90
    %v132 = vmin.f32 16.0, %v131
    %v133 = vmul.f32 %v132, 2.1237322e-06
    %v134 = vadd.f32 %v133, 0.00028619796
    %v135 = vmul.f32 %v132, %v134
    %v136 = vadd.f32 %v135, 0.0036580483
    %v137 = vmul.f32 %v132, %v136
    %v138 = vadd.f32 %v137, 0.05243302
    %v139 = vmul.f32 %v132, %v138
    %v140 = vadd.f32 %v139, 0.18741608
    %v141 = vmul.f32 %v132, %v140
    %v142 = vadd.f32 %v141, 1.1283791
    %v143 = vmul.f32 %v90, %v142
    %v144 = vmul.f32 %v132, 3.8918573e-05
    %v145 = vadd.f32 %v144, 0.001143296
    %v146 = vmul.f32 %v132, %v145
    %v147 = vadd.f32 %v146, 0.014752088
    %v148 = vmul.f32 %v132, %v147
    %v149 = vadd.f32 %v148, 0.112945676
    %v150 = vmul.f32 %v132, %v149
    %v151 = vadd.f32 %v150, 0.4994258
    %v152 = vmul.f32 %v132, %v151
    %v153 = vadd.f32 %v152, 1.0
    %v154 = vrcp.pop %v153
    %v155 = vmul.f32 %v153, %v154
    %v156 = vsub.f32 1.0, %v155
    %v157 = vmul.f32 %v154, %v156
    %v158 = vadd.f32 %v154, %v157
    %vm159 = vweird.f32 %v153
    %vm160 = vweird.f32 %v154
    %vm161 = vmor %vm159, %vm160
    %v162 = vsel %vm161, %v154, %v158
    %v163 = vand.u32 2147483647, %v153
    %vm164 = vcmp.eq.f32.partialorder %v163, 8.507059e+37
    %v165 = vand.u32 %v153, 2147483648
    %v166 = vor.u32 1.1754944e-38, %v165
    %v167 = vsel %vm164, %v166, %v162
    %v168 = vmul.f32 %v143, %v167
    %v169 = vmin.f32 %v168, 1.0
    %v170 = vmax.f32 %v169, -1.0
    %v171 = vadd.f32 %v130, 1.0
    %v172 = vadd.f32 %v170, 1.0
    %v173 = vmul.f32 %v87, %v171
    %v174 = vmul.f32 %v88, %v172
    %175 = vst [vmem:[#allocation7] sm:$0xff] %v173
    %176 = vst [vmem:[#allocation7 + $0x8] sm:$0xff] %v174
    // Predicated region
    $region22: #{tpu_custom_call.1} parent=1 // pred_check
      _
    $region23: #{tpu_custom_call.1} parent=1 // pred_check_branch
      %178 = sbr.rel (0) target = $region25
    $region24: #{tpu_custom_call.1} parent=1 // pred_region
      %180 = vsyncadd [#allocation4], 0
      %s181 = sshll.u32 [#allocation7], 4
      %s182 = int_to_ptr.vmem [resolvable:$true] %s181
      %s183 = sshll.u32 %s3, 4
      %s184 = int_to_ptr.hbm [resolvable:$true] %s183
      %189 = dma.vmem_to_hbm [thread:$0]  %s182, 256, %s184, [#allocation4], 128, 128, 8
    $region25: #{tpu_custom_call.1} parent=1 // pred_fallthru
      _
    // Predicated region
    $region26: #{tpu_custom_call.1} parent=1 // pred_check
      _
    $region27: #{tpu_custom_call.1} parent=1 // pred_check_branch
      %191 = sbr.rel (0) target = $region29
    $region28: #{tpu_custom_call.1} parent=1 // pred_region
      %193 = dma.done [#allocation4], 256
    $region29: #{tpu_custom_call.1} parent=1 // pred_fallthru
      _
    %194 = vsyncpa [#allocation3], 1
    %195 = vsyncpa [#allocation6], 1
    %196 = vsyncpa [#allocation4], 1

</llo_original>
